<compile_context>
chip_gen: v5e
topology: v5e:2x2
jax: 0.10.0
libtpu: 0.0.40
codegen_flags: <defaults>
</compile_context>

<pallas_src>
import functools

import numpy as np
import jax
import jax.numpy as jnp
from jax.experimental import pallas as pl
from jax.experimental.pallas import tpu as pltpu


# --------------------------------------------------------------------------
# Positional table (host-side, identical to the PyTorch module's __init__)
# --------------------------------------------------------------------------
def get_1d_sincos_pos_embed_from_grid(embed_dim, pos):
    if embed_dim % 2 != 0:
        raise ValueError("embed_dim must be divisible by 2")
    omega = np.arange(embed_dim // 2, dtype=np.float64)
    omega /= embed_dim / 2.0
    omega = 1.0 / 10000 ** omega
    pos = pos.reshape(-1)
    out = np.einsum("m,d->md", pos, omega)
    return np.concatenate([np.sin(out), np.cos(out)], axis=1)  # (M, D)


def _round_up(x, m):
    return ((x + m - 1) // m) * m


def _sublane_multiple(itemsize):
    # Native sublane packing: f32 -> 8 rows, bf16 -> 16, int8/fp8 -> 32.
    return 8 * max(1, 4 // itemsize)


# --------------------------------------------------------------------------
# Kernels
# --------------------------------------------------------------------------
def _add_pos_and_store(y, pos_ref, o_ref, *, pos_kind, tm, seq, n_pos_blocks, reps):
    """y: (tm, D) f32 projected rows.  pos_ref is always f32.

    pos_kind:
      "slice"  : pos_ref is the full (S, D) table resident in VMEM; the tile
                 covers rows [off, off+tm) of one sequence -> dynamic VMEM
                 slice (zero HBM traffic per step).
      "reps"   : the tile covers `reps` whole sequences -> broadcast-add the
                 resident (S, D) table over a leading-dim split of y.
      "direct" : pos_ref block already matches the output tile (streamed).
    """
    if pos_kind == "slice":
        if n_pos_blocks <= 1:
            pos = pos_ref[...]
        else:
            off = pl.multiple_of((pl.program_id(0) % n_pos_blocks) * tm, 8)
            pos = pos_ref[pl.ds(off, tm), :]
        o_ref[...] = (y + pos).astype(o_ref.dtype)
    elif pos_kind == "reps":
        d = y.shape[-1]
        y3 = y.reshape(reps, seq, d) + pos_ref[...][None]
        o_ref[...] = y3.reshape(reps * seq, d).astype(o_ref.dtype)
    else:  # "direct"
        o_ref[...] = (y + pos_ref[...]).astype(o_ref.dtype)


def _xembed_kernel_plain(x_ref, w_ref, pos_ref, o_ref, *, epi):
    # Bias pre-folded into pos (no LayerNorm): matmul -> f32 add -> cast.
    y = jnp.dot(x_ref[...], w_ref[...], preferred_element_type=jnp.float32)
    _add_pos_and_store(y, pos_ref, o_ref, **epi)


def _xembed_kernel_ln(x_ref, w_ref, b_ref, pos_ref, o_ref, *, eps, epi):
    y = jnp.dot(x_ref[...], w_ref[...], preferred_element_type=jnp.float32)
    y = y + b_ref[...]  # bias before LN, in f32
    # Two-pass (centered) variance: matches the PyTorch / pure-JAX reference
    # numerics; the extra VPU pass is free on an HBM-bound kernel.
    mean = jnp.mean(y, axis=-1, keepdims=True)
    cen = y - mean
    var = jnp.mean(cen * cen, axis=-1, keepdims=True)
    y = cen * jax.lax.rsqrt(var + eps)
    _add_pos_and_store(y, pos_ref, o_ref, **epi)


# --------------------------------------------------------------------------
# Tiling heuristics (honest VMEM accounting)
# --------------------------------------------------------------------------
def _flat_footprint(tm, C, D, itemsize, sub, pos_bytes, layer_norm):
    """VMEM bytes for one flat-path grid step: double-buffered blocks,
    lane-padded x block, f32 bias and the resident f32 pos table."""
    lane = 128
    x_b = 2 * tm * _round_up(C, lane) * itemsize       # (tm, 8) lays out as (tm, 128)
    w_b = 2 * _round_up(C, sub) * _round_up(D, lane) * itemsize
    o_b = 2 * tm * _round_up(D, lane) * itemsize
    b_b = (2 * 8 * _round_up(D, lane) * 4) if layer_norm else 0
    p_b = 2 * pos_bytes                                # worst case: no Buffered(1)
    return x_b + w_b + o_b + b_b + p_b


def _select_flat(M, S, C, D, itemsize, *, target_rows, vmem_budget, pos_bytes,
                 layer_norm, min_grid_steps=8, min_rows_for_split=256):
    """Row tile for the flattened (B*S, C) layout with a VMEM-resident pos table.

    Returns None when no clean tiling exists (e.g. S not a multiple of 8 and
    larger than the row cap) -> caller falls back to the per-sequence path.
    """
    sub = _sublane_multiple(itemsize)
    cap = max(1, min(target_rows, M))

    # Keep >= min_grid_steps grid steps when tiles stay reasonably large, so
    # both v7x TensorCores get work and per-core pipelining has depth.
    grid_cap = (M // min_grid_steps // sub) * sub
    if grid_cap >= min_rows_for_split:
        cap = min(cap, grid_cap)

    # Shrink until the honestly-accounted VMEM footprint fits the budget.
    while cap > sub and _flat_footprint(cap, C, D, itemsize, sub, pos_bytes,
                                        layer_norm) > vmem_budget:
        cap = max(sub, cap // 2)

    if cap >= S:
        if S % 8 != 0:
            return None  # ragged blocks / reshape -> per-sequence fallback
        reps = max(1, cap // S)
        while reps > 1 and (reps * S) % sub != 0:
            reps -= 1
        return dict(tm=reps * S, pos_kind="reps", n_pos_blocks=1, reps=reps)

    # cap < S: the row tile must evenly divide a sequence so every tile sees a
    # single contiguous slice of the pos table.
    for step in (sub, 8):
        t = (min(cap, S) // step) * step
        while t >= step:
            if S % t == 0:
                return dict(tm=t, pos_kind="slice", n_pos_blocks=S // t, reps=1)
            t -= step
    return None


def _select_seq_tile(S, C, D, itemsize, *, target_rows, vmem_budget, layer_norm):
    """Per-sequence fallback: rows-per-step along S (pos streamed per S-block)."""
    sub = _sublane_multiple(itemsize)
    lane = 128

    def footprint(ts):
        return (2 * ts * _round_up(C, lane) * itemsize
                + 2 * _round_up(C, sub) * _round_up(D, lane) * itemsize
                + 2 * ts * _round_up(D, lane) * itemsize
                + 2 * ts * _round_up(D, lane) * 4                    # f32 pos block
                + ((2 * 8 * _round_up(D, lane) * 4) if layer_norm else 0))

    cap = max(1, min(target_rows, S))
    while cap > sub and footprint(cap) > vmem_budget:
        cap = max(sub, cap // 2)
    if S <= sub:
        return S  # single full-dim block; S need not be 8-aligned in that case
    return max(sub, (min(cap, S) // sub) * sub)


# --------------------------------------------------------------------------
# pallas_call builders
# --------------------------------------------------------------------------
def _const_spec(shape, index_map, single_buffer):
    # Grid-invariant operand: it is DMA'd only once either way (constant block
    # index); Buffered(1) simply halves its VMEM footprint.
    if single_buffer:
        return pl.BlockSpec(shape, index_map, pipeline_mode=pl.Buffered(1))
    return pl.BlockSpec(shape, index_map)


# Narrow fallback set: construction/validation errors and Mosaic lowering
# errors for pl.Buffered(1).  A genuine spec bug would also fail in the
# fallback run (identical math), so nothing is silently masked.
_FALLBACK_ERRORS = (TypeError, ValueError, NotImplementedError,
                    pltpu.LoweringException)


def _run_flat(x2d, w, bias2d_f32, pos_f32, cfg, *, layer_norm, eps, dtype,
              M, S, C, D, vmem_limit_bytes, cost):
    tm = cfg["tm"]
    grid = (pl.cdiv(M, tm),)
    epi = dict(pos_kind=cfg["pos_kind"], tm=tm, seq=S,
               n_pos_blocks=cfg["n_pos_blocks"], reps=cfg["reps"])

    def run(single_buffer):
        x_spec = pl.BlockSpec((tm, C), lambda m: (m, 0))
        w_spec = _const_spec((C, D), lambda m: (0, 0), single_buffer)
        pos_spec = _const_spec((S, D), lambda m: (0, 0), single_buffer)
        out_spec = pl.BlockSpec((tm, D), lambda m: (m, 0))
        if layer_norm:
            b_spec = _const_spec((1, D), lambda m: (0, 0), single_buffer)
            in_specs = [x_spec, w_spec, b_spec, pos_spec]
            kern = functools.partial(_xembed_kernel_ln, eps=eps, epi=epi)
            args = (x2d, w, bias2d_f32, pos_f32)
        else:
            in_specs = [x_spec, w_spec, pos_spec]
            kern = functools.partial(_xembed_kernel_plain, epi=epi)
            args = (x2d, w, pos_f32)
        return pl.pallas_call(
            kern,
            out_shape=jax.ShapeDtypeStruct((M, D), dtype),
            grid_spec=pltpu.PrefetchScalarGridSpec(
                num_scalar_prefetch=0,
                grid=grid,
                in_specs=in_specs,
                out_specs=out_spec,
            ),
            compiler_params=pltpu.CompilerParams(
                dimension_semantics=("parallel",),
                vmem_limit_bytes=vmem_limit_bytes,
            ),
            cost_estimate=cost,
        )(*args)

    try:
        return run(True)
    except _FALLBACK_ERRORS:
        return run(False)  # pl.Buffered(1) unsupported here: default buffering


def _run_seq(latent, w, bias2d_f32, pos_f32, ts, *, layer_norm, eps, dtype,
             B, S, C, D, vmem_limit_bytes, cost):
    # Batch is the innermost grid axis: the pos block index depends only on the
    # outer (seq-block) axis, so it is re-fetched only when the seq-block
    # changes -> total pos HBM traffic is S*D*4 bytes, independent of B.
    grid = (pl.cdiv(S, ts), B)
    epi = dict(pos_kind="direct", tm=ts, seq=S, n_pos_blocks=1, reps=1)

    def run(single_buffer):
        x_spec = pl.BlockSpec((None, ts, C), lambda s, b: (b, s, 0))
        w_spec = _const_spec((C, D), lambda s, b: (0, 0), single_buffer)
        pos_spec = pl.BlockSpec((ts, D), lambda s, b: (s, 0))
        out_spec = pl.BlockSpec((None, ts, D), lambda s, b: (b, s, 0))
        if layer_norm:
            b_spec = _const_spec((1, D), lambda s, b: (0, 0), single_buffer)
            in_specs = [x_spec, w_spec, b_spec, pos_spec]
            kern = functools.partial(_xembed_kernel_ln, eps=eps, epi=epi)
            args = (latent, w, bias2d_f32, pos_f32)
        else:
            in_specs = [x_spec, w_spec, pos_spec]
            kern = functools.partial(_xembed_kernel_plain, epi=epi)
            args = (latent, w, pos_f32)
        return pl.pallas_call(
            kern,
            out_shape=jax.ShapeDtypeStruct((B, S, D), dtype),
            grid_spec=pltpu.PrefetchScalarGridSpec(
                num_scalar_prefetch=0,
                grid=grid,
                in_specs=in_specs,
                out_specs=out_spec,
            ),
            compiler_params=pltpu.CompilerParams(
                dimension_semantics=("parallel", "parallel"),
                vmem_limit_bytes=vmem_limit_bytes,
            ),
            cost_estimate=cost,
        )(*args)

    try:
        return run(True)
    except _FALLBACK_ERRORS:
        return run(False)


# --------------------------------------------------------------------------
# Public wrapper
# --------------------------------------------------------------------------
def xembed_forward(latent, weight, bias, pos_embed, *, layer_norm=False, eps=1e-6,
                   block_rows=1024,
                   vmem_budget_bytes=12 * 1024 * 1024,
                   pos_resident_budget_bytes=4 * 1024 * 1024):
    """XEmbed forward.

    latent:    (B, S, C)  channels-last, as for nn.Linear
    weight:    (C, D)     = torch Linear weight transposed
    bias:      (D,) or None
    pos_embed: (L, D) sin/cos table with L >= S
    Returns:   (B, S, D) in latent.dtype
    """
    B, S, C = latent.shape
    D = weight.shape[1]
    M = B * S
    dtype = latent.dtype
    itemsize = jnp.dtype(dtype).itemsize
    if pos_embed.shape[0] < S:
        raise ValueError("pos_embed table shorter than sequence")

    w = weight.astype(dtype)
    bias_f32 = (jnp.zeros((D,), jnp.float32) if bias is None
                else bias.astype(jnp.float32))
    pos_f32 = pos_embed[:S, :].astype(jnp.float32)
    # No LayerNorm: fold the Linear bias into the f32 pos table -> the kernel
    # epilogue is a single f32 add + cast (and pos stays f32, like the ref).
    pos_src = pos_f32 if layer_norm else pos_f32 + bias_f32[None, :]
    bias2d_f32 = bias_f32.reshape(1, D)

    # Advisory cost estimate for XLA scheduling around the custom call.
    # NOTE: C is deliberately NOT padded to the MXU width - the kernel is
    # HBM-bound and padding would only multiply latent read bytes.
    cost = pl.CostEstimate(
        flops=2 * M * C * D + (10 * M * D if layer_norm else 2 * M * D),
        transcendentals=M if layer_norm else 0,
        bytes_accessed=(M * C + C * D + M * D) * itemsize + (S * D + D) * 4)

    pos_bytes = S * D * 4
    flat_cfg = None
    if pos_bytes <= pos_resident_budget_bytes:
        flat_cfg = _select_flat(M, S, C, D, itemsize,
                                target_rows=block_rows,
                                vmem_budget=vmem_budget_bytes,
                                pos_bytes=pos_bytes,
                                layer_norm=layer_norm)

    if flat_cfg is not None:
        sub = _sublane_multiple(itemsize)
        footprint = _flat_footprint(flat_cfg["tm"], C, D, itemsize, sub,
                                    pos_bytes, layer_norm)
        vmem_limit = int(min(64 << 20, max(footprint + (4 << 20), 32 << 20)))
        out2d = _run_flat(latent.reshape(M, C), w, bias2d_f32, pos_src, flat_cfg,
                          layer_norm=layer_norm, eps=eps, dtype=dtype,
                          M=M, S=S, C=C, D=D,
                          vmem_limit_bytes=vmem_limit, cost=cost)
        return out2d.reshape(B, S, D)

    # Fallback: pos table too large for VMEM residency, or S not 8-aligned.
    ts = _select_seq_tile(S, C, D, itemsize, target_rows=block_rows,
                          vmem_budget=vmem_budget_bytes, layer_norm=layer_norm)
    return _run_seq(latent, w, bias2d_f32, pos_src, ts,
                    layer_norm=layer_norm, eps=eps, dtype=dtype,
                    B=B, S=S, C=C, D=D,
                    vmem_limit_bytes=32 << 20, cost=cost)


# --------------------------------------------------------------------------
# Pure-JAX reference (matches the PyTorch module)
# --------------------------------------------------------------------------
def xembed_reference(latent, weight, bias, pos_embed, *, layer_norm=False, eps=1e-6):
    y = jnp.einsum("bsc,cd->bsd", latent.astype(jnp.float32),
                   weight.astype(jnp.float32))
    if bias is not None:
        y = y + bias.astype(jnp.float32)[None, None, :]
    if layer_norm:
        mu = jnp.mean(y, axis=-1, keepdims=True)
        var = jnp.mean((y - mu) ** 2, axis=-1, keepdims=True)
        y = (y - mu) / jnp.sqrt(var + eps)
    return y + pos_embed[None, : latent.shape[1], :].astype(jnp.float32)


if __name__ == "__main__":
    key = jax.random.PRNGKey(0)

    # (name, B, S, C, D, POS_LEN, layer_norm, dtype, block_rows, rtol, atol)
    # Covers all kernel variants: {plain, LN} x {reps, slice, direct/seq}.
    configs = [
        ("f32_reps",      2, 16,  8, 128,  32, False, jnp.float32,  1024, 1e-5, 1e-5),
        ("f32_reps_ln",   2, 16,  8, 128,  32, True,  jnp.float32,  1024, 1e-4, 1e-4),
        ("f32_slice",     2, 256, 8, 128, 256, False, jnp.float32,   128, 1e-4, 1e-4),
        ("bf16_slice_ln", 4, 64,  8, 256, 128, True,  jnp.bfloat16,   32, 5e-2, 5e-2),
        ("f32_seq",       2, 12,  8, 128,  16, False, jnp.float32,  1024, 1e-5, 1e-5),
        ("bf16_seq_ln",   2, 12,  8, 128,  16, True,  jnp.bfloat16, 1024, 5e-2, 5e-2),
    ]

    for name, B, S, C, D, L, ln, dtype, block_rows, rtol, atol in configs:
        key, k_x, k_w, k_b = jax.random.split(key, 4)

        latent = jax.random.normal(k_x, (B, S, C), dtype=jnp.float32).astype(dtype)
        # nn.Linear(C, D) params; weight stored as (C, D) = torch_weight.T.
        weight = (jax.random.normal(k_w, (C, D), dtype=jnp.float32)
                  * (1.0 / np.sqrt(C))).astype(dtype)
        bias = jax.random.normal(k_b, (D,), dtype=jnp.float32) * 0.1

        pos_embed = jnp.asarray(
            get_1d_sincos_pos_embed_from_grid(D, np.arange(L, dtype=np.float32))
        ).astype(jnp.float32)                                   # (L, D)

        out = xembed_forward(latent, weight, bias, pos_embed,
                             layer_norm=ln, block_rows=block_rows)
        out = jax.block_until_ready(out)
        assert out.shape == (B, S, D) and out.dtype == dtype, name

        ref = xembed_reference(latent, weight, bias, pos_embed, layer_norm=ln)
        np.testing.assert_allclose(np.asarray(out.astype(jnp.float32)),
                                   np.asarray(ref),
                                   rtol=rtol, atol=atol, err_msg=f"config {name}")

    print("KERNEL_OK")
</pallas_src>

<mosaic_0001>
module attributes {stable_mosaic.version = 11 : i64} {
  func.func @_xembed_kernel_plain(%arg0: i32, %arg1: memref<32x8xf32, #tpu.memory_space<vmem>>, %arg2: memref<8x128xf32, #tpu.memory_space<vmem>>, %arg3: memref<16x128xf32, #tpu.memory_space<vmem>>, %arg4: memref<32x128xf32, #tpu.memory_space<vmem>>) attributes {dimension_semantics = [#tpu.dimension_semantics<parallel>], iteration_bounds = array<i64: 1>, scalar_prefetch = 0 : i64, scratch_operands = 0 : i64, tpu.core_type = #tpu.core_type<tc>, window_params = [{transform_indices = @transform_0, window_bounds = array<i64: 32, 8>}, {pipeline_mode = #tpu.pipeline_mode<synchronous>, transform_indices = @transform_1, window_bounds = array<i64: 8, 128>}, {pipeline_mode = #tpu.pipeline_mode<synchronous>, transform_indices = @transform_2, window_bounds = array<i64: 16, 128>}, {transform_indices = @transform_3, window_bounds = array<i64: 32, 128>}]} {
    %c0 = arith.constant 0 : index
    %c0_0 = arith.constant 0 : index
    %0 = vector.load %arg1[%c0, %c0_0] : memref<32x8xf32, #tpu.memory_space<vmem>>, vector<32x8xf32>
    %c0_1 = arith.constant 0 : index
    %c0_2 = arith.constant 0 : index
    %1 = vector.load %arg2[%c0_1, %c0_2] : memref<8x128xf32, #tpu.memory_space<vmem>>, vector<8x128xf32>
    %cst = arith.constant dense<0.000000e+00> : vector<32x128xf32>
    %2 = tpu.matmul %0, %1, %cst {dimension_numbers = #tpu.dot_dimension_numbers<[1], [0], [0], [1], [0, 0, 1, 1], [], []>} : vector<32x8xf32>, vector<8x128xf32>, vector<32x128xf32> -> vector<32x128xf32>
    %3 = vector.shape_cast %2 : vector<32x128xf32> to vector<2x16x128xf32>
    %c0_3 = arith.constant 0 : index
    %c0_4 = arith.constant 0 : index
    %4 = vector.load %arg3[%c0_3, %c0_4] : memref<16x128xf32, #tpu.memory_space<vmem>>, vector<16x128xf32>
    %5 = vector.shape_cast %4 : vector<16x128xf32> to vector<1x16x128xf32>
    %6 = vector.broadcast %5 : vector<1x16x128xf32> to vector<2x16x128xf32>
    %7 = arith.addf %3, %6 : vector<2x16x128xf32>
    %8 = vector.shape_cast %7 : vector<2x16x128xf32> to vector<32x128xf32>
    %c0_5 = arith.constant 0 : index
    %c0_6 = arith.constant 0 : index
    %9 = vector.load %arg4[%c0_5, %c0_6] : memref<32x128xf32, #tpu.memory_space<vmem>>, vector<32x128xf32>
    tpu.vector_store %arg4[%c0_5, %c0_6], %8 {strides = array<i32>} : memref<32x128xf32, #tpu.memory_space<vmem>>, vector<32x128xf32>,
    return
  }
  func.func @transform_0(%arg0: i32) -> (i32, i32) {
    %c0_i32 = arith.constant 0 : i32
    %c0_i32_0 = arith.constant 0 : i32
    return %arg0, %c0_i32 : i32, i32
  }
  func.func @transform_1(%arg0: i32) -> (i32, i32) {
    %c0_i32 = arith.constant 0 : i32
    %c0_i32_0 = arith.constant 0 : i32
    %c0_i32_1 = arith.constant 0 : i32
    return %c0_i32, %c0_i32_0 : i32, i32
  }
  func.func @transform_2(%arg0: i32) -> (i32, i32) {
    %c0_i32 = arith.constant 0 : i32
    %c0_i32_0 = arith.constant 0 : i32
    %c0_i32_1 = arith.constant 0 : i32
    return %c0_i32, %c0_i32_0 : i32, i32
  }
  func.func @transform_3(%arg0: i32) -> (i32, i32) {
    %c0_i32 = arith.constant 0 : i32
    %c0_i32_0 = arith.constant 0 : i32
    return %arg0, %c0_i32 : i32, i32
  }
}

</mosaic_0001>

<llo_original>
// kernel: tpu_custom_call.1
$region0: #{tpu_custom_call.1}
  #allocation0 [shape = 'u32[]', space=smem, size = 0x4, offset = 0x4, fixed_abs, tag = 'smem constant byte address 0x4 - core index']
  #allocation1 [shape = 'u32[72,128]{1,0:T(1,128)}', space=vmem, size = 0x9000, scoped, tag = 'internal scratch']
  %s0 = inlined_call_operand.vmem [shape: f32[32,8], index: 0, kind: input, shape index: {}]
  %s1 = inlined_call_operand.vmem [shape: f32[8,128], index: 1, kind: input, shape index: {}]
  %s2 = inlined_call_operand.vmem [shape: f32[16,128], index: 2, kind: input, shape index: {}]
  %s3 = inlined_call_operand.hbm [shape: f32[32,128], index: 3, kind: output, shape index: {}]
  %s4 = sld [smem:[#allocation0]]
  $region22: #{tpu_custom_call.1} parent=0
    _
  %s6 = ssub.s32 1, %s4
  %s7 = scalar_select 0, %s6, %s4
  $region1: #{tpu_custom_call.1} parent=0
    #allocation2 [shape = 'u8[16384]{0}', space=vmem, size = 0x4000, scoped, tag = 'output window, operand 0, single buffered']
    #allocation3 [shape = 's32[1]{0}', space=sflag, size = 0x4, scoped, tag = 'scoped memory for tpu_custom_call.1']
    %8 = vsyncpa [#allocation3], 0
    // Predicated region
    $region2: #{tpu_custom_call.1} parent=1 // pred_check
      _
    $region3: #{tpu_custom_call.1} parent=1 // pred_check_branch
      %10 = sbr.rel (0) target = $region5
    $region4: #{tpu_custom_call.1} parent=1 // pred_region
      _
    $region5: #{tpu_custom_call.1} parent=1 // pred_fallthru
      _
    // Predicated region
    $region6: #{tpu_custom_call.1} parent=1 // pred_check
      _
    $region7: #{tpu_custom_call.1} parent=1 // pred_check_branch
      %12 = sbr.rel (0) target = $region9
    $region8: #{tpu_custom_call.1} parent=1 // pred_region
      _
    $region9: #{tpu_custom_call.1} parent=1 // pred_fallthru
      _
    // Predicated region
    $region10: #{tpu_custom_call.1} parent=1 // pred_check
      _
    $region11: #{tpu_custom_call.1} parent=1 // pred_check_branch
      %14 = sbr.rel (0) target = $region13
    $region12: #{tpu_custom_call.1} parent=1 // pred_region
      _
    $region13: #{tpu_custom_call.1} parent=1 // pred_fallthru
      _
    %v15 = vld [vmem:[%s0] sm:$0xff]
    %v16 = vld [vmem:[%s0 + $0x8] sm:$0xff]
    %v17 = vld [vmem:[%s0 + $0x10] sm:$0xff]
    %v18 = vld [vmem:[%s0 + $0x18] sm:$0xff]
    %v19 = vld [vmem:[%s1] sm:$0xff]
    %vm20 = vcmask 64512
    %v22 = vsel %vm20, %v15, 0
    %v25 = vsel %vm20, %v16, 0
    %v28 = vsel %vm20, %v17, 0
    %v31 = vsel %vm20, %v18, 0
    %33 = vmatpush.msra.mxu0 0.0
    %34 = vmatpush.msra.mxu0 0.0
    %35 = vmatpush.msra.mxu0 0.0
    %36 = vmatpush.msra.mxu0 0.0
    %37 = vmatpush.msra.mxu0 0.0
    %38 = vmatpush.msra.mxu0 0.0
    %39 = vmatpush.msra.mxu0 0.0
    %40 = vmatpush.msra.mxu0 0.0
    %41 = vmatpush.msra.mxu0 0.0
    %42 = vmatpush.msra.mxu0 0.0
    %43 = vmatpush.msra.mxu0 0.0
    %44 = vmatpush.msra.mxu0 0.0
    %45 = vmatpush.msra.mxu0 0.0
    %46 = vmatpush.msra.mxu0 0.0
    %47 = vmatpush.msra.mxu0 0.0
    %48 = vmatpush.msra.mxu0 %v19
    %49 = vmatmul.f32.gmra.mxu0 %v22
    %v50 = vpop.f32.mrf.mxu0
    %v51 = vadd.f32 0.0, %v50
    %52 = vmatmul.f32.gmra.mxu0 %v25
    %v53 = vpop.f32.mrf.mxu0
    %v54 = vadd.f32 0.0, %v53
    %55 = vmatmul.f32.gmra.mxu0 %v28
    %v56 = vpop.f32.mrf.mxu0
    %v57 = vadd.f32 0.0, %v56
    %58 = vmatmul.f32.gmra.mxu0 %v31
    %v59 = vpop.f32.mrf.mxu0
    %v60 = vadd.f32 0.0, %v59
    %61 = vdwg.mxu0
    %v62 = vld [vmem:[%s2] sm:$0xff]
    %v63 = vld [vmem:[%s2 + $0x8] sm:$0xff]
    %v64 = vadd.f32 %v51, %v62
    %v65 = vadd.f32 %v54, %v63
    %v66 = vadd.f32 %v57, %v62
    %v67 = vadd.f32 %v60, %v63
    %68 = vst [vmem:[#allocation2] sm:$0xff] %v64
    %69 = vst [vmem:[#allocation2 + $0x8] sm:$0xff] %v65
    %70 = vst [vmem:[#allocation2 + $0x10] sm:$0xff] %v66
    %71 = vst [vmem:[#allocation2 + $0x18] sm:$0xff] %v67
    // Predicated region
    $region14: #{tpu_custom_call.1} parent=1 // pred_check
      _
    $region15: #{tpu_custom_call.1} parent=1 // pred_check_branch
      %73 = sbr.rel (0) target = $region17
    $region16: #{tpu_custom_call.1} parent=1 // pred_region
      %75 = vsyncadd [#allocation3], 0
      %s76 = sshll.u32 [#allocation2], 4
      %s77 = int_to_ptr.vmem [resolvable:$true] %s76
      %s78 = sshll.u32 %s3, 4
      %s79 = int_to_ptr.hbm [resolvable:$true] %s78
      %84 = dma.vmem_to_hbm [thread:$0]  %s77, 512, %s79, [#allocation3], 128, 128, 8
    $region17: #{tpu_custom_call.1} parent=1 // pred_fallthru
      _
    // Predicated region
    $region18: #{tpu_custom_call.1} parent=1 // pred_check
      _
    $region19: #{tpu_custom_call.1} parent=1 // pred_check_branch
      %86 = sbr.rel (0) target = $region21
    $region20: #{tpu_custom_call.1} parent=1 // pred_region
      %88 = dma.done [#allocation3], 512
    $region21: #{tpu_custom_call.1} parent=1 // pred_fallthru
      _
    %89 = vsyncpa [#allocation3], 1

</llo_original>
